<compile_context>
chip_gen: v7x
topology: tpu7x:2x2x1
jax: 0.10.0
libtpu: 0.0.40
codegen_flags: <defaults>
</compile_context>

<pallas_src>
import functools
import math

import jax
import jax.numpy as jnp
from jax import lax
from jax.experimental import pallas as pl
from jax.experimental.pallas import tpu as pltpu


# ----------------------------------------------------------------------------
# helpers
# ----------------------------------------------------------------------------
def _rup(x, m):
    return ((x + m - 1) // m) * m


# ----------------------------------------------------------------------------
# Pallas GEMM: single K step, fp32 accumulate + epilogue, bf16 MXU inputs.
# ----------------------------------------------------------------------------
def _mm_kernel(a_ref, b_ref, bias_ref, o_ref, *, relu):
    acc = jnp.dot(a_ref[...], b_ref[...], preferred_element_type=jnp.float32)
    acc = acc + bias_ref[...]
    if relu:
        acc = jnp.maximum(acc, 0.0)
    o_ref[...] = acc.astype(o_ref.dtype)


def pallas_matmul(a, b, bias=None, relu=False, out_dtype=jnp.float32):
    """(M,K) @ (K,N) + bias, optional ReLU.

    K is always a single full-extent step (no K padding copies). N is kept
    full-extent/unpadded when it is not a multiple of 128 (masked stores cost
    less than 4-8x padded writeback at these sizes). M gets >=2 parallel
    blocks whenever there is enough work for v7x's second TensorCore.
    """
    M, K = a.shape
    K2, N = b.shape
    assert K == K2

    if N % 256 == 0:
        tn = 256
    elif N % 128 == 0:
        tn = 128
    else:
        tn = N                      # full-extent lane dim, no padding/slice
    if M <= 256:
        tm = M if M % 8 == 0 else _rup(M, 8)
    else:
        tm = 256 if (M % 256 == 0 or M >= 512) else 128
    Mp = _rup(M, tm)

    a_bf = a.astype(jnp.bfloat16)
    b_bf = b.astype(jnp.bfloat16)
    if Mp != M:
        a_bf = jnp.zeros((Mp, K), jnp.bfloat16).at[:M].set(a_bf)
    if bias is None:
        bias_f = jnp.zeros((1, N), jnp.float32)
    else:
        bias_f = bias.astype(jnp.float32).reshape(1, N)

    out = pl.pallas_call(
        functools.partial(_mm_kernel, relu=relu),
        out_shape=jax.ShapeDtypeStruct((Mp, N), out_dtype),
        grid=(Mp // tm, N // tn),
        in_specs=[
            pl.BlockSpec((tm, K), lambda i, j: (i, 0)),
            pl.BlockSpec((K, tn), lambda i, j: (0, j)),
            pl.BlockSpec((1, tn), lambda i, j: (0, j)),
        ],
        out_specs=pl.BlockSpec((tm, tn), lambda i, j: (i, j)),
        compiler_params=pltpu.CompilerParams(
            dimension_semantics=("parallel", "parallel"),
            vmem_limit_bytes=32 * 1024 * 1024),
    )(a_bf, b_bf, bias_f)
    if Mp != M:
        out = out[:M]
    return out


# ----------------------------------------------------------------------------
# Fused box head: fc1 -> fc2 -> predictor -> masked softmax, one pallas_call.
# ----------------------------------------------------------------------------
def _box_head_kernel(x_ref, w1_ref, b1_ref, w2_ref, b2_ref, wp_ref, bp_ref,
                     pred_ref, prob_ref, *, num_classes):
    h1 = jnp.dot(x_ref[...], w1_ref[...], preferred_element_type=jnp.float32)
    h1 = jnp.maximum(h1 + b1_ref[...], 0.0)
    h2 = jnp.dot(h1.astype(jnp.bfloat16), w2_ref[...],
                 preferred_element_type=jnp.float32)
    h2 = jnp.maximum(h2 + b2_ref[...], 0.0)
    pred = jnp.dot(h2.astype(jnp.bfloat16), wp_ref[...],
                   preferred_element_type=jnp.float32) + bp_ref[...]
    pred_ref[...] = pred
    # masked softmax over the first num_classes lanes (exact division: scores
    # near the 0.05 threshold must not flip vs. the fp32 reference).
    col = lax.broadcasted_iota(jnp.int32, pred.shape, 1)
    cls_mask = col < num_classes
    logits = jnp.where(cls_mask, pred, -1e30)
    m = jnp.max(logits, axis=-1, keepdims=True)
    e = jnp.where(cls_mask, jnp.exp(logits - m), 0.0)
    prob_ref[...] = e / jnp.sum(e, axis=-1, keepdims=True)


def pallas_box_head(flat, fc1, fc2, pred_w, pred_b, num_classes):
    """flat: (R, in_feat) -> (pred (R, 5C), probs (R, C)); all GEMMs fused."""
    R, _ = flat.shape
    Rp = _rup(R, 8)
    x = flat.astype(jnp.bfloat16)
    if Rp != R:
        x = jnp.zeros((Rp, flat.shape[1]), jnp.bfloat16).at[:R].set(x)
    n_pred = pred_w.shape[1]
    pred, probs = pl.pallas_call(
        functools.partial(_box_head_kernel, num_classes=num_classes),
        out_shape=(jax.ShapeDtypeStruct((Rp, n_pred), jnp.float32),
                   jax.ShapeDtypeStruct((Rp, n_pred), jnp.float32)),
        compiler_params=pltpu.CompilerParams(
            vmem_limit_bytes=32 * 1024 * 1024),
    )(x,
      fc1[0].astype(jnp.bfloat16), fc1[1].reshape(1, -1).astype(jnp.float32),
      fc2[0].astype(jnp.bfloat16), fc2[1].reshape(1, -1).astype(jnp.float32),
      pred_w.astype(jnp.bfloat16), pred_b.reshape(1, -1).astype(jnp.float32))
    return pred[:R], probs[:R, :num_classes]


# ----------------------------------------------------------------------------
# Fused pairwise IoU + greedy NMS (IoU matrix lives in VMEM scratch).
# ----------------------------------------------------------------------------
def _iou_nms_kernel(bt_ref, valid_ref, keep_ref, iou_ref, *, thr, num_boxes):
    bt = bt_ref[0]                       # (8, Rp) lane-dense coords (rows 0..3)
    bc = jnp.transpose(bt)               # (Rp, 8) column-oriented coords (XLU)
    x1c, y1c = bc[:, 0:1], bc[:, 1:2]
    x2c, y2c = bc[:, 2:3], bc[:, 3:4]
    x1r, y1r = bt[0:1, :], bt[1:2, :]
    x2r, y2r = bt[2:3, :], bt[3:4, :]
    area_c = (x2c - x1c) * (y2c - y1c)
    area_r = (x2r - x1r) * (y2r - y1r)
    xx1 = jnp.maximum(x1c, x1r)
    yy1 = jnp.maximum(y1c, y1r)
    xx2 = jnp.minimum(x2c, x2r)
    yy2 = jnp.minimum(y2c, y2r)
    inter = jnp.maximum(xx2 - xx1, 0.0) * jnp.maximum(yy2 - yy1, 0.0)
    union = jnp.maximum(area_c + area_r - inter, 1e-6)
    iou_ref[...] = inter / union         # (Rp, Rp) stays resident in VMEM

    rp = bt.shape[1]
    col = lax.broadcasted_iota(jnp.int32, (1, rp), 1)
    valid = valid_ref[0]                 # (1, Rp) 0/1

    def body(i, keep):
        row = iou_ref[pl.ds(i, 1), :]                               # (1, Rp)
        sup = jnp.max(jnp.where((row > thr) & (keep > 0.5) & (col < i),
                                1.0, 0.0), axis=-1, keepdims=True)  # (1, 1)
        return jnp.where(col == i, valid * (1.0 - sup), keep)

    keep = lax.fori_loop(0, num_boxes, body, jnp.zeros((1, rp), jnp.float32))
    keep_ref[0] = keep


def pallas_nms(boxes, valid, thr):
    """boxes: (B,R,4) score-sorted, valid: (B,R) bool -> keep mask (B,R)."""
    B, R, _ = boxes.shape
    Rp = _rup(R, 128)
    bt = jnp.zeros((B, 8, Rp), jnp.float32).at[:, :4, :R].set(
        jnp.transpose(boxes.astype(jnp.float32), (0, 2, 1)))
    vp = jnp.zeros((B, 1, Rp), jnp.float32).at[:, 0, :R].set(
        valid.astype(jnp.float32))
    keep = pl.pallas_call(
        functools.partial(_iou_nms_kernel, thr=float(thr), num_boxes=R),
        out_shape=jax.ShapeDtypeStruct((B, 1, Rp), jnp.float32),
        grid=(B,),
        in_specs=[
            pl.BlockSpec((1, 8, Rp), lambda b: (b, 0, 0)),
            pl.BlockSpec((1, 1, Rp), lambda b: (b, 0, 0)),
        ],
        out_specs=pl.BlockSpec((1, 1, Rp), lambda b: (b, 0, 0)),
        scratch_shapes=[pltpu.VMEM((Rp, Rp), jnp.float32)],
        compiler_params=pltpu.CompilerParams(
            dimension_semantics=("parallel",)),
    )(bt, vp)
    return keep[:, 0, :R] > 0.5


# ----------------------------------------------------------------------------
# Plain-JAX glue
# ----------------------------------------------------------------------------
def conv2d(x, w, b, stride=1, pad=0, relu=False, out_dtype=jnp.bfloat16):
    """x: (N,H,W,Cin), w: (kh,kw,Cin,Cout). bf16 im2col + Pallas GEMM."""
    kh, kw, cin, cout = w.shape
    x = x.astype(jnp.bfloat16)
    if pad > 0:
        x = jnp.pad(x, ((0, 0), (pad, pad), (pad, pad), (0, 0)))
    N, H, W, _ = x.shape
    Ho = (H - kh) // stride + 1
    Wo = (W - kw) // stride + 1
    if kh == 1 and kw == 1 and stride == 1:
        patches = x
    else:
        # TODO(synk): replace the im2col concatenate with in-kernel tap
        # accumulation (shifted-window DMA per tap) to remove the kh*kw-inflated
        # HBM copy entirely; it is kept in bf16 here to halve that traffic.
        cols = []
        for dh in range(kh):
            for dw in range(kw):
                cols.append(x[:, dh:dh + stride * Ho:stride,
                              dw:dw + stride * Wo:stride, :])
        patches = jnp.concatenate(cols, axis=-1)
    a = patches.reshape(N * Ho * Wo, kh * kw * cin)
    out = pallas_matmul(a, w.reshape(kh * kw * cin, cout), b,
                        relu=relu, out_dtype=out_dtype)
    return out.reshape(N, Ho, Wo, cout)


def im2col_3x3_s1(x):
    """3x3/stride-1/pad-1 patches (bf16). Returns ((N*H*W, 9C), (H, W))."""
    x = jnp.pad(x.astype(jnp.bfloat16), ((0, 0), (1, 1), (1, 1), (0, 0)))
    N, Hp, Wp, C = x.shape
    Ho, Wo = Hp - 2, Wp - 2
    cols = [x[:, dh:dh + Ho, dw:dw + Wo, :]
            for dh in range(3) for dw in range(3)]
    patches = jnp.concatenate(cols, axis=-1).reshape(N * Ho * Wo, 9 * C)
    return patches, (Ho, Wo)


_BBOX_XFORM_CLIP = math.log(1000.0 / 16)


def decode_boxes(deltas, anchors, weights):
    wx, wy, ww, wh = weights
    aw = anchors[..., 2] - anchors[..., 0]
    ah = anchors[..., 3] - anchors[..., 1]
    ax = anchors[..., 0] + 0.5 * aw
    ay = anchors[..., 1] + 0.5 * ah
    dx = deltas[..., 0] / wx
    dy = deltas[..., 1] / wy
    dw = jnp.minimum(deltas[..., 2] / ww, _BBOX_XFORM_CLIP)
    dh = jnp.minimum(deltas[..., 3] / wh, _BBOX_XFORM_CLIP)
    px = dx * aw + ax
    py = dy * ah + ay
    pw = jnp.exp(dw) * aw
    ph = jnp.exp(dh) * ah
    return jnp.stack([px - 0.5 * pw, py - 0.5 * ph,
                      px + 0.5 * pw, py + 0.5 * ph], axis=-1)


def clip_boxes(boxes, h, w):
    x1 = jnp.clip(boxes[..., 0], 0.0, float(w))
    y1 = jnp.clip(boxes[..., 1], 0.0, float(h))
    x2 = jnp.clip(boxes[..., 2], 0.0, float(w))
    y2 = jnp.clip(boxes[..., 3], 0.0, float(h))
    return jnp.stack([x1, y1, x2, y2], axis=-1)


def make_anchors(H, W, stride, size, ratios=(0.5, 1.0, 2.0)):
    ys = (jnp.arange(H, dtype=jnp.float32) + 0.5) * stride
    xs = (jnp.arange(W, dtype=jnp.float32) + 0.5) * stride
    cy, cx = jnp.meshgrid(ys, xs, indexing="ij")
    per_ratio = []
    for r in ratios:
        h = size * math.sqrt(r)
        w = size / math.sqrt(r)
        per_ratio.append(jnp.stack([cx - w / 2, cy - h / 2,
                                    cx + w / 2, cy + h / 2], axis=-1))
    return jnp.stack(per_ratio, axis=2).reshape(-1, 4)   # (H*W*A, 4)


def roi_align_level(feat, rois, batch_idx, spatial_scale, out, sr):
    """Bilinear RoIAlign on one level (aligned=False semantics)."""
    Nimg, H, W, C = feat.shape
    R = rois.shape[0]
    S = out * sr
    x1 = rois[:, 0] * spatial_scale
    y1 = rois[:, 1] * spatial_scale
    x2 = rois[:, 2] * spatial_scale
    y2 = rois[:, 3] * spatial_scale
    rw = jnp.maximum(x2 - x1, 1.0)
    rh = jnp.maximum(y2 - y1, 1.0)
    t = (jnp.arange(S, dtype=jnp.float32) + 0.5) / (sr * out)
    sy = jnp.clip(y1[:, None] + t[None, :] * rh[:, None], 0.0, H - 1.0)
    sx = jnp.clip(x1[:, None] + t[None, :] * rw[:, None], 0.0, W - 1.0)
    y0 = jnp.floor(sy)
    x0 = jnp.floor(sx)
    y0i = y0.astype(jnp.int32)
    x0i = x0.astype(jnp.int32)
    y1i = jnp.minimum(y0i + 1, H - 1)
    x1i = jnp.minimum(x0i + 1, W - 1)
    ly, lx = sy - y0, sx - x0
    hy, hx = 1.0 - ly, 1.0 - lx

    fimg = feat[batch_idx].astype(jnp.float32)               # (R,H,W,C)

    def gather_y(yi):
        idx = jnp.broadcast_to(yi[:, :, None, None], (R, S, W, C))
        return jnp.take_along_axis(fimg, idx, axis=1)        # (R,S,W,C)

    def gather_x(fy, xi):
        idx = jnp.broadcast_to(xi[:, None, :, None], (R, S, S, C))
        return jnp.take_along_axis(fy, idx, axis=2)          # (R,S,S,C)

    fy0, fy1 = gather_y(y0i), gather_y(y1i)
    v00, v01 = gather_x(fy0, x0i), gather_x(fy0, x1i)
    v10, v11 = gather_x(fy1, x0i), gather_x(fy1, x1i)
    wy0, wy1 = hy[:, :, None, None], ly[:, :, None, None]
    wx0, wx1 = hx[:, None, :, None], lx[:, None, :, None]
    samples = (wy0 * wx0 * v00 + wy0 * wx1 * v01 +
               wy1 * wx0 * v10 + wy1 * wx1 * v11)
    return samples.reshape(R, out, sr, out, sr, C).mean(axis=(2, 4))


def roi_align_multiscale(feats, strides, rois, batch_idx, out, sr):
    w = rois[:, 2] - rois[:, 0]
    h = rois[:, 3] - rois[:, 1]
    scale = jnp.sqrt(jnp.maximum(w * h, 1e-6))
    lvl = jnp.floor(4.0 + jnp.log2(scale / 224.0 + 1e-6))
    lvl = jnp.clip(lvl, 2, 5).astype(jnp.int32) - 2
    R, C = rois.shape[0], feats[0].shape[-1]
    pooled = jnp.zeros((R, out, out, C), jnp.float32)
    # TODO(synk): evaluates every level then selects (static shapes); a
    # scalar-prefetch Pallas gather over the per-RoI level index would do the
    # bilinear sampling once per RoI and keep the samples in VMEM.
    for li, (f, s) in enumerate(zip(feats, strides)):
        p = roi_align_level(f, rois, batch_idx, 1.0 / s, out, sr)
        pooled = jnp.where((lvl == li)[:, None, None, None], p, pooled)
    return pooled


# ----------------------------------------------------------------------------
# Model
# ----------------------------------------------------------------------------
class FasterRCNNResNet50:
    NUM_CLASSES = 14
    FPN_CH = 32
    NUM_ANCHORS = 3
    POST_NMS_TOP_N = 16          # proposals kept per image
    POOL = 14                    # MultiScaleRoIAlign output_size
    SAMPLING_RATIO = 4
    REP = 128                    # TwoMLPHead representation size (scaled down)
    DETECTIONS_PER_IMG = 100

    def __init__(self, key, num_classes=14, nms_iou_threshold=0.5,
                 score_threshold=0.05):
        self.num_classes = num_classes
        self.nms_iou_threshold = nms_iou_threshold
        self.score_threshold = score_threshold

        keys = iter(jax.random.split(key, 64))

        def conv_p(kh, kw, cin, cout):
            k1, k2 = jax.random.split(next(keys))
            w = jax.random.normal(k1, (kh, kw, cin, cout), jnp.float32)
            w = w / math.sqrt(kh * kw * cin)
            b = jax.random.normal(k2, (cout,), jnp.float32) * 0.01
            return w, b

        def fc_p(din, dout):
            k1, k2 = jax.random.split(next(keys))
            w = jax.random.normal(k1, (din, dout), jnp.float32) / math.sqrt(din)
            b = jax.random.normal(k2, (dout,), jnp.float32) * 0.01
            return w, b

        # scaled-down ResNet-style backbone (stem + layer1..4, stride 2 each)
        chans = [(3, 16), (16, 32), (32, 64), (64, 128), (128, 128)]
        self.backbone = [conv_p(3, 3, ci, co) for ci, co in chans]
        # FPN laterals (1x1) and output convs (3x3)
        self.lateral = [conv_p(1, 1, c, self.FPN_CH) for c in (32, 64, 128, 128)]
        self.fpn_out = [conv_p(3, 3, self.FPN_CH, self.FPN_CH) for _ in range(4)]
        # RPN head (shared across levels)
        self.rpn_conv = conv_p(3, 3, self.FPN_CH, self.FPN_CH)
        self.rpn_cls = conv_p(1, 1, self.FPN_CH, self.NUM_ANCHORS)
        self.rpn_box = conv_p(1, 1, self.FPN_CH, 4 * self.NUM_ANCHORS)
        # fused tiny-N RPN head: objectness + box deltas in one lane-dense GEMM
        self.rpn_head_w = jnp.concatenate(
            [self.rpn_cls[0].reshape(self.FPN_CH, self.NUM_ANCHORS),
             self.rpn_box[0].reshape(self.FPN_CH, 4 * self.NUM_ANCHORS)],
            axis=-1)                                            # (32, A+4A)
        self.rpn_head_b = jnp.concatenate([self.rpn_cls[1], self.rpn_box[1]],
                                          axis=-1)
        # TwoMLPHead + FastRCNNPredictor
        in_feat = self.FPN_CH * self.POOL * self.POOL
        self.fc1 = fc_p(in_feat, self.REP)
        self.fc2 = fc_p(self.REP, self.REP)
        self.cls_score = fc_p(self.REP, self.num_classes)
        self.bbox_pred = fc_p(self.REP, self.num_classes * 4)
        # fused predictor head: class logits + box deltas in one GEMM
        self.predictor_w = jnp.concatenate([self.cls_score[0],
                                            self.bbox_pred[0]], axis=-1)
        self.predictor_b = jnp.concatenate([self.cls_score[1],
                                            self.bbox_pred[1]], axis=-1)

    def __call__(self, images):
        # images: (N, 3, H, W) NCHW like PyTorch -> NHWC for the kernels
        x = jnp.transpose(images, (0, 2, 3, 1)).astype(jnp.float32)
        N, H_img, W_img, _ = x.shape

        # ---- backbone ----
        feats = []
        for i, (w, b) in enumerate(self.backbone):
            x = conv2d(x, w, b, stride=2, pad=1, relu=True,
                       out_dtype=jnp.bfloat16)
            if i >= 1:
                feats.append(x)          # C2..C5
        c2, c3, c4, c5 = feats

        # ---- FPN ----
        laterals = [conv2d(c, w, b, out_dtype=jnp.bfloat16)
                    for c, (w, b) in zip((c2, c3, c4, c5), self.lateral)]
        inners = [None] * 4
        inners[3] = laterals[3]
        for i in range(2, -1, -1):
            up = jnp.repeat(jnp.repeat(inners[i + 1], 2, axis=1), 2, axis=2)
            inners[i] = laterals[i] + up
        pyramid = [conv2d(inn, w, b, stride=1, pad=1, out_dtype=jnp.bfloat16)
                   for inn, (w, b) in zip(inners, self.fpn_out)]
        strides = [4, 8, 16, 32]
        sizes = [32.0, 64.0, 128.0, 256.0]

        # ---- RPN: head batched across FPN levels (2 GEMMs instead of 8) ----
        A = self.NUM_ANCHORS
        level_rows, level_hw = [], []
        for p in pyramid:
            patches, hw = im2col_3x3_s1(p)
            level_rows.append(patches)
            level_hw.append(hw)
        rpn_in = jnp.concatenate(level_rows, axis=0)       # (sum N*H*W, 9*FC)
        t = pallas_matmul(
            rpn_in, self.rpn_conv[0].reshape(9 * self.FPN_CH, self.FPN_CH),
            self.rpn_conv[1], relu=True, out_dtype=jnp.bfloat16)
        head = pallas_matmul(t, self.rpn_head_w, self.rpn_head_b,
                             out_dtype=jnp.float32)        # (rows, A+4A)

        all_boxes, all_scores = [], []
        off = 0
        for (Hh, Ww), s, sz in zip(level_hw, strides, sizes):
            rows = N * Hh * Ww
            lvl = head[off:off + rows].reshape(N, Hh, Ww, 5 * A)
            off += rows
            obj = lvl[..., :A]
            deltas = lvl[..., A:].reshape(N, Hh * Ww * A, 4)
            anchors = make_anchors(Hh, Ww, s, sz)
            boxes = decode_boxes(deltas, anchors[None], (1.0, 1.0, 1.0, 1.0))
            boxes = clip_boxes(boxes, H_img, W_img)
            all_boxes.append(boxes)
            all_scores.append(jax.nn.sigmoid(obj.reshape(N, -1)))
        boxes_all = jnp.concatenate(all_boxes, axis=1)
        scores_all = jnp.concatenate(all_scores, axis=1)
        # TODO(synk): per-level RPN NMS is skipped; proposals are top-k by score.
        _, top_i = lax.top_k(scores_all, self.POST_NMS_TOP_N)
        proposals = jnp.take_along_axis(
            boxes_all,
            jnp.broadcast_to(top_i[..., None], (N, self.POST_NMS_TOP_N, 4)),
            axis=1)                                          # (N, P, 4)

        # ---- RoI heads (fully fused box head + softmax) ----
        P = self.POST_NMS_TOP_N
        C = self.num_classes
        rois = proposals.reshape(-1, 4)
        batch_idx = jnp.repeat(jnp.arange(N), P)
        pooled = roi_align_multiscale(pyramid, strides, rois, batch_idx,
                                      self.POOL, self.SAMPLING_RATIO)
        flat = pooled.reshape(rois.shape[0], -1)
        pred, probs = pallas_box_head(flat, self.fc1, self.fc2,
                                      self.predictor_w, self.predictor_b, C)
        bbox_deltas = pred[:, C:]                             # (N*P, 4C)

        # ---- batched postprocess: score filter + class-aware fused NMS ----
        probs_b = probs.reshape(N, P, C)
        deltas_b = bbox_deltas.reshape(N, P, C, 4)
        boxes_b = decode_boxes(deltas_b, proposals[:, :, None, :],
                               (10.0, 10.0, 5.0, 5.0))       # (N,P,C,4)
        boxes_b = clip_boxes(boxes_b, H_img, W_img)
        R = P * (C - 1)
        boxes_f = boxes_b[:, :, 1:, :].reshape(N, R, 4)      # drop background
        scores_f = probs_b[:, :, 1:].reshape(N, R)
        labels_f = jnp.broadcast_to(
            jnp.arange(1, C, dtype=jnp.int32)[None, None, :],
            (N, P, C - 1)).reshape(N, R)
        ws = boxes_f[..., 2] - boxes_f[..., 0]
        hs = boxes_f[..., 3] - boxes_f[..., 1]
        valid = (scores_f > self.score_threshold) & (ws > 1e-2) & (hs > 1e-2)

        order = jnp.argsort(-scores_f, axis=1)
        boxes_s = jnp.take_along_axis(
            boxes_f, jnp.broadcast_to(order[..., None], (N, R, 4)), axis=1)
        scores_s = jnp.take_along_axis(scores_f, order, axis=1)
        labels_s = jnp.take_along_axis(labels_f, order, axis=1)
        valid_s = jnp.take_along_axis(valid, order, axis=1)

        # class-aware NMS (offset boxes per class, like batched_nms);
        # pairwise IoU + the greedy suppression loop run inside one kernel.
        offset = labels_s.astype(jnp.float32)[..., None] * (
            float(max(H_img, W_img)) + 10.0)
        keep = pallas_nms(boxes_s + offset, valid_s, self.nms_iou_threshold)
        keep = keep & (jnp.cumsum(keep.astype(jnp.int32), axis=1)
                       <= self.DETECTIONS_PER_IMG)

        # TODO(synk): PyTorch returns variably-sized filtered tensors;
        # JAX needs static shapes, so we return full arrays + a keep mask.
        outputs = []
        for b in range(N):
            outputs.append({"boxes": boxes_s[b], "scores": scores_s[b],
                            "labels": labels_s[b], "keep": keep[b]})
        return outputs


# ----------------------------------------------------------------------------
if __name__ == "__main__":
    key = jax.random.PRNGKey(0)
    pkey, xkey = jax.random.split(key)
    model = FasterRCNNResNet50(pkey, num_classes=14,
                               nms_iou_threshold=0.5, score_threshold=0.05)
    images = jax.random.uniform(xkey, (2, 3, 64, 64), jnp.float32)  # NCHW
    outs = model(images)
    for o in outs:
        jax.block_until_ready(o["boxes"])
        jax.block_until_ready(o["scores"])
        jax.block_until_ready(o["labels"])
        jax.block_until_ready(o["keep"])
    print("KERNEL_OK")
</pallas_src>

<mosaic_0001>
module attributes {stable_mosaic.version = 11 : i64} {
  func.func @_mm_kernel(%arg0: i32, %arg1: i32, %arg2: memref<256x27xbf16, #tpu.memory_space<vmem>>, %arg3: memref<27x16xbf16, #tpu.memory_space<vmem>>, %arg4: memref<1x16xf32, #tpu.memory_space<vmem>>, %arg5: memref<256x16xbf16, #tpu.memory_space<vmem>>) attributes {dimension_semantics = [#tpu.dimension_semantics<parallel>, #tpu.dimension_semantics<parallel>], iteration_bounds = array<i64: 8, 1>, scalar_prefetch = 0 : i64, scratch_operands = 0 : i64, tpu.core_type = #tpu.core_type<tc>, window_params = [{transform_indices = @transform_0, window_bounds = array<i64: 256, 27>}, {transform_indices = @transform_1, window_bounds = array<i64: 27, 16>}, {transform_indices = @transform_2, window_bounds = array<i64: 1, 16>}, {transform_indices = @transform_3, window_bounds = array<i64: 256, 16>}]} {
    %c0 = arith.constant 0 : index
    %c0_0 = arith.constant 0 : index
    %0 = vector.load %arg2[%c0, %c0_0] : memref<256x27xbf16, #tpu.memory_space<vmem>>, vector<256x27xbf16>
    %c0_1 = arith.constant 0 : index
    %c0_2 = arith.constant 0 : index
    %1 = vector.load %arg3[%c0_1, %c0_2] : memref<27x16xbf16, #tpu.memory_space<vmem>>, vector<27x16xbf16>
    %cst = arith.constant dense<0.000000e+00> : vector<256x16xf32>
    %2 = tpu.matmul %0, %1, %cst {dimension_numbers = #tpu.dot_dimension_numbers<[1], [0], [0], [1], [0, 0, 1, 1], [], []>} : vector<256x27xbf16>, vector<27x16xbf16>, vector<256x16xf32> -> vector<256x16xf32>
    %c0_3 = arith.constant 0 : index
    %c0_4 = arith.constant 0 : index
    %3 = vector.load %arg4[%c0_3, %c0_4] : memref<1x16xf32, #tpu.memory_space<vmem>>, vector<1x16xf32>
    %4 = vector.broadcast %3 : vector<1x16xf32> to vector<256x16xf32>
    %5 = arith.addf %2, %4 : vector<256x16xf32>
    %cst_5 = arith.constant 0.000000e+00 : f32
    %6 = vector.broadcast %cst_5 : f32 to vector<256x16xf32>
    %7 = arith.maximumf %5, %6 : vector<256x16xf32>
    %8 = arith.truncf %7 : vector<256x16xf32> to vector<256x16xbf16>
    %c0_6 = arith.constant 0 : index
    %c0_7 = arith.constant 0 : index
    %9 = vector.load %arg5[%c0_6, %c0_7] : memref<256x16xbf16, #tpu.memory_space<vmem>>, vector<256x16xbf16>
    tpu.vector_store %arg5[%c0_6, %c0_7], %8 {strides = array<i32>} : memref<256x16xbf16, #tpu.memory_space<vmem>>, vector<256x16xbf16>,
    return
  }
  func.func @transform_0(%arg0: i32, %arg1: i32) -> (i32, i32) {
    %c0_i32 = arith.constant 0 : i32
    %c0_i32_0 = arith.constant 0 : i32
    return %arg0, %c0_i32 : i32, i32
  }
  func.func @transform_1(%arg0: i32, %arg1: i32) -> (i32, i32) {
    %c0_i32 = arith.constant 0 : i32
    %c0_i32_0 = arith.constant 0 : i32
    return %c0_i32, %arg1 : i32, i32
  }
  func.func @transform_2(%arg0: i32, %arg1: i32) -> (i32, i32) {
    %c0_i32 = arith.constant 0 : i32
    %c0_i32_0 = arith.constant 0 : i32
    return %c0_i32, %arg1 : i32, i32
  }
  func.func @transform_3(%arg0: i32, %arg1: i32) -> (i32, i32) {
    %c0_i32 = arith.constant 0 : i32
    return %arg0, %arg1 : i32, i32
  }
}

</mosaic_0001>

<llo_original>
// kernel: tpu_custom_call.1
$region0: #{tpu_custom_call.1}
  #allocation0 [shape = 'u32[]', space=smem, size = 0x4, offset = 0x4, fixed_abs, tag = 'smem constant byte address 0x4 - core index']
  #allocation1 [shape = 'u32[144,128]{1,0:T(1,128)}', space=vmem, size = 0x12000, scoped, tag = 'internal scratch']
  %s0 = inlined_call_operand.vmem [shape: bf16[2048,27], index: 0, kind: input, shape index: {}]
  %s1 = inlined_call_operand.vmem [shape: bf16[27,16], index: 1, kind: input, shape index: {}]
  %s2 = inlined_call_operand.vmem [shape: f32[1,16], index: 2, kind: input, shape index: {}]
  %s3 = inlined_call_operand.vmem [shape: bf16[2048,16], index: 3, kind: output, shape index: {}]
  %s4 = sld [smem:[#allocation0]]
  $region45: #{tpu_custom_call.1} parent=0
    _
  %s6 = ssub.s32 1, %s4
  %s7 = scalar_select 0, %s6, %s4
  loop: start=0, step=1, limit=10
  $region2: #{tpu_custom_call.1} parent=0 // loop_pre_header
    _
  $region3: #{tpu_custom_call.1} parent=0 // loop_header
    %s9 = sphi 0, %s13
    %p10 = scmp.ge.s32.totalorder %s9, 10
    %s16 = sphi 0, %s28
    %s17 = sphi 0, %s24
    %s18 = sphi 0, %s16
    %s19 = sphi 0, %s17
    %s20 = sphi 0, %s18
    %s21 = sphi 0, %s19
    %s31 = sphi 0, %s33
    %s34 = sphi 0, %s31
    %s35 = sphi 0, %s34
    %s51 = sphi 0, %s35
    %s57 = sphi 0, %s59
    %s60 = sphi 0, %s57
    %s61 = sphi 0, %s60
    %s77 = sphi 0, %s61
    %s83 = sphi 0, %s85
    %s86 = sphi 0, %s83
    %s87 = sphi 0, %s86
    %s103 = sphi 0, %s87
    %s111 = sphi 0, %s113
    %s114 = sphi 0, %s111
    %s115 = sphi 0, %s114
    %s131 = sphi 0, %s115
  $region4: #{tpu_custom_call.1} parent=0 // loop_header_branch
    %12 = sbr.rel (%p10) target = $region8
  $region5: #{tpu_custom_call.1} parent=0 // loop_body
    %s14 = ssub.s32 %s9, 1
    %s15 = ssub.s32 %s9, 2
    %s22 = sadd.s32 1, %s17
    %p23 = scmp.ge.s32.totalorder %s22, 1
    %s24 = scalar_select %p23, 0, %s22
    %s25 = sadd.s32 1, %s16
    %s26 = scalar_select %p23, %s25, %s16
    %p27 = scmp.ge.s32.totalorder %s26, 8
    %s28 = scalar_select %p27, 0, %s26
    %s29 = ssub.s32 %s16, %s28
    %p30 = scmp.eq.s32.totalorder %s29, 0
    %s32 = sadd.s32 %s31, 1
    %s33 = scalar_select %p30, %s31, %s32
    %p36 = pneg %p30
    %p37 = scmp.eq.s32.totalorder %s9, 7
    %p38 = por %p36, %p37
    %p39 = scmp.ne.s32.totalorder %s31, %s34
    %p40 = scmp.eq.s32.totalorder %s9, 0
    %p41 = por %p39, %p40
    %p42 = scmp.ne.s32.totalorder %s31, %s34
    %p43 = scmp.eq.s32.totalorder %s14, 7
    %p44 = por %p42, %p43
    %p45 = scmp.ne.s32.totalorder %s34, %s35
    %p46 = scmp.eq.s32.totalorder %s14, 0
    %p47 = por %p45, %p46
    %p48 = scmp.ne.s32.totalorder %s34, %s35
    %p49 = scmp.eq.s32.totalorder %s15, 7
    %p50 = por %p48, %p49
    %p52 = scmp.ne.s32.totalorder %s35, %s51
    %p53 = scmp.eq.s32.totalorder %s15, 0
    %p54 = por %p52, %p53
    %s55 = ssub.s32 %s17, %s24
    %p56 = scmp.eq.s32.totalorder %s55, 0
    %s58 = sadd.s32 %s57, 1
    %s59 = scalar_select %p56, %s57, %s58
    %p62 = pneg %p56
    %p63 = scmp.eq.s32.totalorder %s9, 7
    %p64 = por %p62, %p63
    %p65 = scmp.ne.s32.totalorder %s57, %s60
    %p66 = scmp.eq.s32.totalorder %s9, 0
    %p67 = por %p65, %p66
    %p68 = scmp.ne.s32.totalorder %s57, %s60
    %p69 = scmp.eq.s32.totalorder %s14, 7
    %p70 = por %p68, %p69
    %p71 = scmp.ne.s32.totalorder %s60, %s61
    %p72 = scmp.eq.s32.totalorder %s14, 0
    %p73 = por %p71, %p72
    %p74 = scmp.ne.s32.totalorder %s60, %s61
    %p75 = scmp.eq.s32.totalorder %s15, 7
    %p76 = por %p74, %p75
    %p78 = scmp.ne.s32.totalorder %s61, %s77
    %p79 = scmp.eq.s32.totalorder %s15, 0
    %p80 = por %p78, %p79
    %s81 = ssub.s32 %s17, %s24
    %p82 = scmp.eq.s32.totalorder %s81, 0
    %s84 = sadd.s32 %s83, 1
    %s85 = scalar_select %p82, %s83, %s84
    %p88 = pneg %p82
    %p89 = scmp.eq.s32.totalorder %s9, 7
    %p90 = por %p88, %p89
    %p91 = scmp.ne.s32.totalorder %s83, %s86
    %p92 = scmp.eq.s32.totalorder %s9, 0
    %p93 = por %p91, %p92
    %p94 = scmp.ne.s32.totalorder %s83, %s86
    %p95 = scmp.eq.s32.totalorder %s14, 7
    %p96 = por %p94, %p95
    %p97 = scmp.ne.s32.totalorder %s86, %s87
    %p98 = scmp.eq.s32.totalorder %s14, 0
    %p99 = por %p97, %p98
    %p100 = scmp.ne.s32.totalorder %s86, %s87
    %p101 = scmp.eq.s32.totalorder %s15, 7
    %p102 = por %p100, %p101
    %p104 = scmp.ne.s32.totalorder %s87, %s103
    %p105 = scmp.eq.s32.totalorder %s15, 0
    %p106 = por %p104, %p105
    %s107 = ssub.s32 %s16, %s28
    %s108 = ssub.s32 %s17, %s24
    %s109 = sor.u32 %s107, %s108
    %p110 = scmp.eq.s32.totalorder %s109, 0
    %s112 = sadd.s32 %s111, 1
    %s113 = scalar_select %p110, %s111, %s112
    %p116 = pneg %p110
    %p117 = scmp.eq.s32.totalorder %s9, 7
    %p118 = por %p116, %p117
    %p119 = scmp.ne.s32.totalorder %s111, %s114
    %p120 = scmp.eq.s32.totalorder %s9, 0
    %p121 = por %p119, %p120
    %p122 = scmp.ne.s32.totalorder %s111, %s114
    %p123 = scmp.eq.s32.totalorder %s14, 7
    %p124 = por %p122, %p123
    %p125 = scmp.ne.s32.totalorder %s114, %s115
    %p126 = scmp.eq.s32.totalorder %s14, 0
    %p127 = por %p125, %p126
    %p128 = scmp.ne.s32.totalorder %s114, %s115
    %p129 = scmp.eq.s32.totalorder %s15, 7
    %p130 = por %p128, %p129
    %p132 = scmp.ne.s32.totalorder %s115, %s131
    %p133 = scmp.eq.s32.totalorder %s15, 0
    %p134 = por %p132, %p133
    %p135 = scmp.le.s32.totalorder 1, %s9
    %p136 = scmp.lt.s32.totalorder %s9, 9
    %p137 = pnand %p135, %p136
    %p138 = pneg %p137
    // Predicated region
    $region9: #{tpu_custom_call.1} parent=5 // pred_check
      _
    $region10: #{tpu_custom_call.1} parent=5 // pred_check_branch
      %140 = sbr.rel (%p137) target = $region12
    $region11: #{tpu_custom_call.1} parent=5 // pred_region
      %s141 = ssub.s32 %s9, 1
      // Predicated region
      $region13: #{tpu_custom_call.1} parent=11 // pred_check
        %p142 = pneg %p73
      $region14: #{tpu_custom_call.1} parent=11 // pred_check_branch
        %144 = sbr.rel (%p142) target = $region16
      $region15: #{tpu_custom_call.1} parent=11 // pred_region
        %p145 = scmp.lt.s32.totalorder %s19, 0
        %s146 = scalar_select %p145, %s19, 0
        %s147 = smul.addr %s146, 4
        %s148 = scalar_lea.vmem %s1, %s147
      $region16: #{tpu_custom_call.1} parent=11 // pred_fallthru
        _
      // Predicated region
      $region17: #{tpu_custom_call.1} parent=11 // pred_check
        %p149 = pneg %p99
      $region18: #{tpu_custom_call.1} parent=11 // pred_check_branch
        %151 = sbr.rel (%p149) target = $region20
      $region19: #{tpu_custom_call.1} parent=11 // pred_region
        %p152 = scmp.lt.s32.totalorder %s19, 0
        %s153 = scalar_select %p152, %s19, 0
        %s154 = scalar_lea.vmem %s2, %s153
      $region20: #{tpu_custom_call.1} parent=11 // pred_fallthru
        _
    $region12: #{tpu_custom_call.1} parent=5 // pred_fallthru
      _
    %p155 = scmp.lt.s32.totalorder %s9, 8
    // Predicated region
    $region21: #{tpu_custom_call.1} parent=5 // pred_check
      %p156 = pneg %p155
    $region22: #{tpu_custom_call.1} parent=5 // pred_check_branch
      %158 = sbr.rel (%p156) target = $region24
    $region23: #{tpu_custom_call.1} parent=5 // pred_region
      // Predicated region
      $region25: #{tpu_custom_call.1} parent=23 // pred_check
        %p159 = pneg %p41
      $region26: #{tpu_custom_call.1} parent=23 // pred_check_branch
        %161 = sbr.rel (%p159) target = $region28
      $region27: #{tpu_custom_call.1} parent=23 // pred_region
        %s162 = smul.u32 32, %s16
        %p163 = scmp.lt.s32.totalorder %s162, 255
        %s164 = scalar_select %p163, %s162, 255
        %s165 = smul.addr %s164, 4
        %s166 = scalar_lea.vmem %s0, %s165
        %s167 = smul.u32 32, %s16
      $region28: #{tpu_custom_call.1} parent=23 // pred_fallthru
        _
    $region24: #{tpu_custom_call.1} parent=5 // pred_fallthru
      _
    %p168 = scmp.le.s32.totalorder 1, %s9
    %p169 = scmp.lt.s32.totalorder %s9, 9
    %p170 = pnand %p168, %p169
    %p171 = pneg %p170
    // Predicated region
    $region29: #{tpu_custom_call.1} parent=5 // pred_check
      _
    $region30: #{tpu_custom_call.1} parent=5 // pred_check_branch
      %173 = sbr.rel (%p170) target = $region32
    $region31: #{tpu_custom_call.1} parent=5 // pred_region
      %s174 = ssub.s32 %s9, 1
      %s175 = smul.u32 32, %s18
      %p176 = scmp.lt.s32.totalorder %s175, 255
      %s177 = scalar_select %p176, %s175, 255
      %s178 = smul.addr %s177, 4
      %s179 = scalar_lea.vmem %s0, %s178
      %p180 = pneg %p47
      %p181 = pneg %p44
      %p182 = scmp.lt.s32.totalorder %s19, 0
      %s183 = scalar_select %p182, %s19, 0
      %s184 = smul.addr %s183, 4
      %s185 = scalar_lea.vmem %s1, %s184
      %p186 = pneg %p73
      %p187 = pneg %p70
      %p188 = scmp.lt.s32.totalorder %s19, 0
      %s189 = scalar_select %p188, %s19, 0
      %s190 = scalar_lea.vmem %s2, %s189
      %p191 = pneg %p99
      %p192 = pneg %p96
      %p193 = pneg %p127
      %p194 = pneg %p124
      %s195 = smul.u32 32, %s18
      %p196 = scmp.lt.s32.totalorder %s195, 255
      %s197 = scalar_select %p196, %s195, 255
      %p198 = scmp.lt.s32.totalorder %s19, 0
      %s199 = scalar_select %p198, %s19, 0
      %s200 = sadd.s32 %s199, %s197
      %s201 = smul.addr %s200, 4
      %s202 = scalar_lea.vmem %s3, %s201
      %s203 = smul.u32 32, %s18
      %p204 = scmp.lt.s32.totalorder %s203, 255
      %s205 = scalar_select %p204, %s203, 255
      %s206 = smul.addr %s205, 4
      %s207 = scalar_lea.vmem %s0, %s206
      %s208 = smul.u32 32, %s18
      %p209 = scmp.lt.s32.totalorder %s19, 0
      %s210 = scalar_select %p209, %s19, 0
      %s211 = smul.addr %s210, 4
      %s212 = scalar_lea.vmem %s1, %s211
      %p213 = scmp.lt.s32.totalorder %s19, 0
      %s214 = scalar_select %p213, %s19, 0
      %s215 = scalar_lea.vmem %s2, %s214
      %s216 = smul.u32 32, %s18
      %p217 = scmp.lt.s32.totalorder %s216, 255
      %s218 = scalar_select %p217, %s216, 255
      %p219 = scmp.lt.s32.totalorder %s19, 0
      %s220 = scalar_select %p219, %s19, 0
      %s221 = sadd.s32 %s220, %s218
      %s222 = smul.addr %s221, 4
      %s223 = scalar_lea.vmem %s3, %s222
      %s224 = smul.u32 32, %s18
      %v226 = vld [vmem:[%s207] sm:$0xf]
      %v227 = vld [vmem:[%s207 + $0x4] sm:$0xf]
      %v228 = vld [vmem:[%s207 + $0x8] sm:$0xf]
      %v229 = vld [vmem:[%s207 + $0xc] sm:$0xf]
      %v230 = vld [vmem:[%s207 + $0x10] sm:$0xf]
      %v231 = vld [vmem:[%s207 + $0x14] sm:$0xf]
      %v232 = vld [vmem:[%s207 + $0x18] sm:$0xf]
      %v233 = vld [vmem:[%s207 + $0x1c] sm:$0xf]
      %v234 = vld [vmem:[%s207 + $0x20] sm:$0xf]
      %v235 = vld [vmem:[%s207 + $0x24] sm:$0xf]
      %v236 = vld [vmem:[%s207 + $0x28] sm:$0xf]
      %v237 = vld [vmem:[%s207 + $0x2c] sm:$0xf]
      %v238 = vld [vmem:[%s207 + $0x30] sm:$0xf]
      %v239 = vld [vmem:[%s207 + $0x34] sm:$0xf]
      %v240 = vld [vmem:[%s207 + $0x38] sm:$0xf]
      %v241 = vld [vmem:[%s207 + $0x3c] sm:$0xf]
      %v242 = vld [vmem:[%s207 + $0x40] sm:$0xf]
      %v243 = vld [vmem:[%s207 + $0x44] sm:$0xf]
      %v244 = vld [vmem:[%s207 + $0x48] sm:$0xf]
      %v245 = vld [vmem:[%s207 + $0x4c] sm:$0xf]
      %v246 = vld [vmem:[%s207 + $0x50] sm:$0xf]
      %v247 = vld [vmem:[%s207 + $0x54] sm:$0xf]
      %v248 = vld [vmem:[%s207 + $0x58] sm:$0xf]
      %v249 = vld [vmem:[%s207 + $0x5c] sm:$0xf]
      %v250 = vld [vmem:[%s207 + $0x60] sm:$0xf]
      %v251 = vld [vmem:[%s207 + $0x64] sm:$0xf]
      %v252 = vld [vmem:[%s207 + $0x68] sm:$0xf]
      %v253 = vld [vmem:[%s207 + $0x6c] sm:$0xf]
      %v254 = vld [vmem:[%s207 + $0x70] sm:$0xf]
      %v255 = vld [vmem:[%s207 + $0x74] sm:$0xf]
      %v256 = vld [vmem:[%s207 + $0x78] sm:$0xf]
      %v257 = vld [vmem:[%s207 + $0x7c] sm:$0xf]
      %v258 = vld [vmem:[%s212] sm:$0xf]
      %v259 = vld [vmem:[%s212 + $0x4] sm:$0xf]
      %v260 = vld [vmem:[%s212 + $0x8] sm:$0xf]
      %v261 = vld [vmem:[%s212 + $0xc] sm:$0x3]
      %v262 = vld [vmem:[%s215] sm:$0x1]
      %v264 = vlaneseq
      %v265 = vshrl.u32 %v264, 7
      %v266 = vsub.s32 0, %v265
      %v267 = vrot.slane %v262, %v266
      %v301 = vunpack.c.l.b16 %v226
      %v302 = vunpack.c.l.b16 %v227
      %v303 = vunpack.c.l.b16 %v228
      %v304 = vunpack.c.l.b16 %v229
      %v305 = vunpack.c.l.b16 %v230
      %v306 = vunpack.c.l.b16 %v231
      %v307 = vunpack.c.l.b16 %v232
      %v308 = vunpack.c.l.b16 %v233
      %v309 = vunpack.c.l.b16 %v234
      %v310 = vunpack.c.l.b16 %v235
      %v311 = vunpack.c.l.b16 %v236
      %v312 = vunpack.c.l.b16 %v237
      %v313 = vunpack.c.l.b16 %v238
      %v314 = vunpack.c.l.b16 %v239
      %v315 = vunpack.c.l.b16 %v240
      %v316 = vunpack.c.l.b16 %v241
      %v317 = vunpack.c.l.b16 %v242
      %v318 = vunpack.c.l.b16 %v243
      %v319 = vunpack.c.l.b16 %v244
      %v320 = vunpack.c.l.b16 %v245
      %v321 = vunpack.c.l.b16 %v246
      %v322 = vunpack.c.l.b16 %v247
      %v323 = vunpack.c.l.b16 %v248
      %v324 = vunpack.c.l.b16 %v249
      %v325 = vunpack.c.l.b16 %v250
      %v326 = vunpack.c.l.b16 %v251
      %v327 = vunpack.c.l.b16 %v252
      %v328 = vunpack.c.l.b16 %v253
      %v329 = vunpack.c.l.b16 %v254
      %v330 = vunpack.c.l.b16 %v255
      %v331 = vunpack.c.l.b16 %v256
      %v332 = vunpack.c.l.b16 %v257
      %v333 = vpack.c.b16 %v302, %v301
      %v334 = vpack.c.b16 %v304, %v303
      %v335 = vpack.c.b16 %v306, %v305
      %v336 = vpack.c.b16 %v308, %v307
      %v337 = vpack.c.b16 %v310, %v309
      %v338 = vpack.c.b16 %v312, %v311
      %v339 = vpack.c.b16 %v314, %v313
      %v340 = vpack.c.b16 %v316, %v315
      %v341 = vpack.c.b16 %v318, %v317
      %v342 = vpack.c.b16 %v320, %v319
      %v343 = vpack.c.b16 %v322, %v321
      %v344 = vpack.c.b16 %v324, %v323
      %v345 = vpack.c.b16 %v326, %v325
      %v346 = vpack.c.b16 %v328, %v327
      %v347 = vpack.c.b16 %v330, %v329
      %v348 = vpack.c.b16 %v332, %v331
      %v353 = vunpack.c.l.b16 %v258
      %v354 = vunpack.c.l.b16 %v259
      %v355 = vunpack.c.l.b16 %v260
      %v356 = vunpack.c.l.b16 %v261
      %v357 = vpack.c.b16 %v354, %v353
      %v358 = vpack.c.b16 %v356, %v355
      %vm360 = vcmask 220160
      %v362 = vsel %vm360, %v333, 0
      %v365 = vsel %vm360, %v334, 0
      %v368 = vsel %vm360, %v335, 0
      %v371 = vsel %vm360, %v336, 0
      %v374 = vsel %vm360, %v337, 0
      %v377 = vsel %vm360, %v338, 0
      %v380 = vsel %vm360, %v339, 0
      %v383 = vsel %vm360, %v340, 0
      %v386 = vsel %vm360, %v341, 0
      %v389 = vsel %vm360, %v342, 0
      %v392 = vsel %vm360, %v343, 0
      %v395 = vsel %vm360, %v344, 0
      %v398 = vsel %vm360, %v345, 0
      %v401 = vsel %vm360, %v346, 0
      %v404 = vsel %vm360, %v347, 0
      %v407 = vsel %vm360, %v348, 0
      %vm409 = vcmask 1044480
      %vm410 = vcmask 1045504
      %v411 = vsel %vm409, 4294967295, 65535
      %v412 = vsel %vm410, %v411, 0
      %v414 = vand.u32 %v358, %v412
      %416 = vmatprep.subr.bf16.mxu0 0
      %417 = vmatpush1.bf16.msra.mxu0 %v357
      %418 = vmatprep.subr.bf16.mxu0 0
      %419 = vmatpush1.bf16.msra.mxu0 %v414
      %420 = vmatprep.subr.bf16.mxu0 0
      %421 = vmatpush1.bf16.msra.mxu0 0
      %422 = vmatprep.subr.bf16.mxu0 0
      %423 = vmatpush1.bf16.msra.mxu0 0
      %424 = vmatprep.subr.bf16.mxu0 0
      %425 = vmatpush1.bf16.msra.mxu0 0
      %426 = vmatprep.subr.bf16.mxu0 0
      %427 = vmatpush1.bf16.msra.mxu0 0
      %428 = vmatprep.subr.bf16.mxu0 0
      %429 = vmatpush1.bf16.msra.mxu0 0
      %430 = vmatprep.subr.bf16.mxu0 0
      %431 = vmatpush1.bf16.msra.mxu0 0
      %432 = vmatprep.subr.bf16.mxu0 0
      %433 = vmatpush1.bf16.msra.mxu0 0
      %434 = vmatprep.subr.bf16.mxu0 0
      %435 = vmatpush1.bf16.msra.mxu0 0
      %436 = vmatprep.subr.bf16.mxu0 0
      %437 = vmatpush1.bf16.msra.mxu0 0
      %438 = vmatprep.subr.bf16.mxu0 0
      %439 = vmatpush1.bf16.msra.mxu0 0
      %440 = vmatprep.subr.bf16.mxu0 0
      %441 = vmatpush1.bf16.msra.mxu0 0
      %442 = vmatprep.subr.bf16.mxu0 0
      %443 = vmatpush1.bf16.msra.mxu0 0
      %444 = vmatprep.subr.bf16.mxu0 0
      %445 = vmatpush1.bf16.msra.mxu0 0
      %446 = vmatprep.subr.bf16.mxu0 0
      %447 = vmatpush1.bf16.msra.mxu0 0
      %448 = vmatprep.mubr.bf16.mxu0 0
      %449 = vmatmul.mubr.bf16.gmra.mrb[0].mxu0 %v362
      %v450 = vpop.f32.mrb[0].mxu0
      %v451 = vadd.f32 %v267, %v450
      %v452 = vpop.f32.mrb[0].mxu0
      %v453 = vpop.f32.mrb[0].mxu0
      %v454 = vadd.f32 %v267, %v453
      %v455 = vpop.f32.mrb[0].mxu0
      %456 = vmatprep.mubr.bf16.mxu0 0
      %457 = vmatmul.mubr.bf16.gmra.mrb[0].mxu0 %v365
      %v458 = vpop.f32.mrb[0].mxu0
      %v459 = vadd.f32 %v267, %v458
      %v460 = vpop.f32.mrb[0].mxu0
      %v461 = vpop.f32.mrb[0].mxu0
      %v462 = vadd.f32 %v267, %v461
      %v463 = vpop.f32.mrb[0].mxu0
      %464 = vmatprep.mubr.bf16.mxu0 0
      %465 = vmatmul.mubr.bf16.gmra.mrb[0].mxu0 %v368
      %v466 = vpop.f32.mrb[0].mxu0
      %v467 = vadd.f32 %v267, %v466
      %v468 = vpop.f32.mrb[0].mxu0
      %v469 = vpop.f32.mrb[0].mxu0
      %v470 = vadd.f32 %v267, %v469
      %v471 = vpop.f32.mrb[0].mxu0
      %472 = vmatprep.mubr.bf16.mxu0 0
      %473 = vmatmul.mubr.bf16.gmra.mrb[0].mxu0 %v371
      %v474 = vpop.f32.mrb[0].mxu0
      %v475 = vadd.f32 %v267, %v474
      %v476 = vpop.f32.mrb[0].mxu0
      %v477 = vpop.f32.mrb[0].mxu0
      %v478 = vadd.f32 %v267, %v477
      %v479 = vpop.f32.mrb[0].mxu0
      %480 = vmatprep.mubr.bf16.mxu0 0
      %481 = vmatmul.mubr.bf16.gmra.mrb[0].mxu0 %v374
      %v482 = vpop.f32.mrb[0].mxu0
      %v483 = vadd.f32 %v267, %v482
      %v484 = vpop.f32.mrb[0].mxu0
      %v485 = vpop.f32.mrb[0].mxu0
      %v486 = vadd.f32 %v267, %v485
      %v487 = vpop.f32.mrb[0].mxu0
      %488 = vmatprep.mubr.bf16.mxu0 0
      %489 = vmatmul.mubr.bf16.gmra.mrb[0].mxu0 %v377
      %v490 = vpop.f32.mrb[0].mxu0
      %v491 = vadd.f32 %v267, %v490
      %v492 = vpop.f32.mrb[0].mxu0
      %v493 = vpop.f32.mrb[0].mxu0
      %v494 = vadd.f32 %v267, %v493
      %v495 = vpop.f32.mrb[0].mxu0
      %496 = vmatprep.mubr.bf16.mxu0 0
      %497 = vmatmul.mubr.bf16.gmra.mrb[0].mxu0 %v380
      %v498 = vpop.f32.mrb[0].mxu0
      %v499 = vadd.f32 %v267, %v498
      %v500 = vpop.f32.mrb[0].mxu0
      %v501 = vpop.f32.mrb[0].mxu0
      %v502 = vadd.f32 %v267, %v501
      %v503 = vpop.f32.mrb[0].mxu0
      %504 = vmatprep.mubr.bf16.mxu0 0
      %505 = vmatmul.mubr.bf16.gmra.mrb[0].mxu0 %v383
      %v506 = vpop.f32.mrb[0].mxu0
      %v507 = vadd.f32 %v267, %v506
      %v508 = vpop.f32.mrb[0].mxu0
      %v509 = vpop.f32.mrb[0].mxu0
      %v510 = vadd.f32 %v267, %v509
      %v511 = vpop.f32.mrb[0].mxu0
      %512 = vmatprep.mubr.bf16.mxu0 0
      %513 = vmatmul.mubr.bf16.gmra.mrb[0].mxu0 %v386
      %v514 = vpop.f32.mrb[0].mxu0
      %v515 = vadd.f32 %v267, %v514
      %v516 = vpop.f32.mrb[0].mxu0
      %v517 = vpop.f32.mrb[0].mxu0
      %v518 = vadd.f32 %v267, %v517
      %v519 = vpop.f32.mrb[0].mxu0
      %520 = vmatprep.mubr.bf16.mxu0 0
      %521 = vmatmul.mubr.bf16.gmra.mrb[0].mxu0 %v389
      %v522 = vpop.f32.mrb[0].mxu0
      %v523 = vadd.f32 %v267, %v522
      %v524 = vpop.f32.mrb[0].mxu0
      %v525 = vpop.f32.mrb[0].mxu0
      %v526 = vadd.f32 %v267, %v525
      %v527 = vpop.f32.mrb[0].mxu0
      %528 = vmatprep.mubr.bf16.mxu0 0
      %529 = vmatmul.mubr.bf16.gmra.mrb[0].mxu0 %v392
      %v530 = vpop.f32.mrb[0].mxu0
      %v531 = vadd.f32 %v267, %v530
      %v532 = vpop.f32.mrb[0].mxu0
      %v533 = vpop.f32.mrb[0].mxu0
      %v534 = vadd.f32 %v267, %v533
      %v535 = vpop.f32.mrb[0].mxu0
      %536 = vmatprep.mubr.bf16.mxu0 0
      %537 = vmatmul.mubr.bf16.gmra.mrb[0].mxu0 %v395
      %v538 = vpop.f32.mrb[0].mxu0
      %v539 = vadd.f32 %v267, %v538
      %v540 = vpop.f32.mrb[0].mxu0
      %v541 = vpop.f32.mrb[0].mxu0
      %v542 = vadd.f32 %v267, %v541
      %v543 = vpop.f32.mrb[0].mxu0
      %544 = vmatprep.mubr.bf16.mxu0 0
      %545 = vmatmul.mubr.bf16.gmra.mrb[0].mxu0 %v398
      %v546 = vpop.f32.mrb[0].mxu0
      %v547 = vadd.f32 %v267, %v546
      %v548 = vpop.f32.mrb[0].mxu0
      %v549 = vpop.f32.mrb[0].mxu0
      %v550 = vadd.f32 %v267, %v549
      %v551 = vpop.f32.mrb[0].mxu0
      %552 = vmatprep.mubr.bf16.mxu0 0
      %553 = vmatmul.mubr.bf16.gmra.mrb[0].mxu0 %v401
      %v554 = vpop.f32.mrb[0].mxu0
      %v555 = vadd.f32 %v267, %v554
      %v556 = vpop.f32.mrb[0].mxu0
      %v557 = vpop.f32.mrb[0].mxu0
      %v558 = vadd.f32 %v267, %v557
      %v559 = vpop.f32.mrb[0].mxu0
      %560 = vmatprep.mubr.bf16.mxu0 0
      %561 = vmatmul.mubr.bf16.gmra.mrb[0].mxu0 %v404
      %v562 = vpop.f32.mrb[0].mxu0
      %v563 = vadd.f32 %v267, %v562
      %v564 = vpop.f32.mrb[0].mxu0
      %v565 = vpop.f32.mrb[0].mxu0
      %v566 = vadd.f32 %v267, %v565
      %v567 = vpop.f32.mrb[0].mxu0
      %568 = vmatprep.mubr.bf16.mxu0 0
      %569 = vmatmul.mubr.bf16.gmra.mrb[0].mxu0 %v407
      %v570 = vpop.f32.mrb[0].mxu0
      %v571 = vadd.f32 %v267, %v570
      %v572 = vpop.f32.mrb[0].mxu0
      %v573 = vpop.f32.mrb[0].mxu0
      %v574 = vadd.f32 %v267, %v573
      %v575 = vpop.f32.mrb[0].mxu0
      %576 = vdwg.mxu0
      %v577 = vmax.f32 %v451, 0.0
      %v578 = vmax.f32 %v454, 0.0
      %v579 = vmax.f32 %v459, 0.0
      %v580 = vmax.f32 %v462, 0.0
      %v581 = vmax.f32 %v467, 0.0
      %v582 = vmax.f32 %v470, 0.0
      %v583 = vmax.f32 %v475, 0.0
      %v584 = vmax.f32 %v478, 0.0
      %v585 = vmax.f32 %v483, 0.0
      %v586 = vmax.f32 %v486, 0.0
      %v587 = vmax.f32 %v491, 0.0
      %v588 = vmax.f32 %v494, 0.0
      %v589 = vmax.f32 %v499, 0.0
      %v590 = vmax.f32 %v502, 0.0
      %v591 = vmax.f32 %v507, 0.0
      %v592 = vmax.f32 %v510, 0.0
      %v593 = vmax.f32 %v515, 0.0
      %v594 = vmax.f32 %v518, 0.0
      %v595 = vmax.f32 %v523, 0.0
      %v596 = vmax.f32 %v526, 0.0
      %v597 = vmax.f32 %v531, 0.0
      %v598 = vmax.f32 %v534, 0.0
      %v599 = vmax.f32 %v539, 0.0
      %v600 = vmax.f32 %v542, 0.0
      %v601 = vmax.f32 %v547, 0.0
      %v602 = vmax.f32 %v550, 0.0
      %v603 = vmax.f32 %v555, 0.0
      %v604 = vmax.f32 %v558, 0.0
      %v605 = vmax.f32 %v563, 0.0
      %v606 = vmax.f32 %v566, 0.0
      %v607 = vmax.f32 %v571, 0.0
      %v608 = vmax.f32 %v574, 0.0
      %v609 = vpack.c.bf16 %v578, %v577
      %v610 = vpack.c.bf16 %v580, %v579
      %v611 = vpack.c.bf16 %v582, %v581
      %v612 = vpack.c.bf16 %v584, %v583
      %v613 = vpack.c.bf16 %v586, %v585
      %v614 = vpack.c.bf16 %v588, %v587
      %v615 = vpack.c.bf16 %v590, %v589
      %v616 = vpack.c.bf16 %v592, %v591
      %v617 = vpack.c.bf16 %v594, %v593
      %v618 = vpack.c.bf16 %v596, %v595
      %v619 = vpack.c.bf16 %v598, %v597
      %v620 = vpack.c.bf16 %v600, %v599
      %v621 = vpack.c.bf16 %v602, %v601
      %v622 = vpack.c.bf16 %v604, %v603
      %v623 = vpack.c.bf16 %v606, %v605
      %v624 = vpack.c.bf16 %v608, %v607
      %v641 = vunpack.c.l.b16 %v609
      %v642 = vunpack.c.h.b16 %v609
      %v643 = vunpack.c.l.b16 %v610
      %v644 = vunpack.c.h.b16 %v610
      %v645 = vunpack.c.l.b16 %v611
      %v646 = vunpack.c.h.b16 %v611
      %v647 = vunpack.c.l.b16 %v612
      %v648 = vunpack.c.h.b16 %v612
      %v649 = vunpack.c.l.b16 %v613
      %v650 = vunpack.c.h.b16 %v613
      %v651 = vunpack.c.l.b16 %v614
      %v652 = vunpack.c.h.b16 %v614
      %v653 = vunpack.c.l.b16 %v615
      %v654 = vunpack.c.h.b16 %v615
      %v655 = vunpack.c.l.b16 %v616
      %v656 = vunpack.c.h.b16 %v616
      %v657 = vunpack.c.l.b16 %v617
      %v658 = vunpack.c.h.b16 %v617
      %v659 = vunpack.c.l.b16 %v618
      %v660 = vunpack.c.h.b16 %v618
      %v661 = vunpack.c.l.b16 %v619
      %v662 = vunpack.c.h.b16 %v619
      %v663 = vunpack.c.l.b16 %v620
      %v664 = vunpack.c.h.b16 %v620
      %v665 = vunpack.c.l.b16 %v621
      %v666 = vunpack.c.h.b16 %v621
      %v667 = vunpack.c.l.b16 %v622
      %v668 = vunpack.c.h.b16 %v622
      %v669 = vunpack.c.l.b16 %v623
      %v670 = vunpack.c.h.b16 %v623
      %v671 = vunpack.c.l.b16 %v624
      %v672 = vunpack.c.h.b16 %v624
      %v673 = vpack.c.b16 %v641, %v641
      %v674 = vpack.c.b16 %v642, %v642
      %v675 = vpack.c.b16 %v643, %v643
      %v676 = vpack.c.b16 %v644, %v644
      %v677 = vpack.c.b16 %v645, %v645
      %v678 = vpack.c.b16 %v646, %v646
      %v679 = vpack.c.b16 %v647, %v647
      %v680 = vpack.c.b16 %v648, %v648
      %v681 = vpack.c.b16 %v649, %v649
      %v682 = vpack.c.b16 %v650, %v650
      %v683 = vpack.c.b16 %v651, %v651
      %v684 = vpack.c.b16 %v652, %v652
      %v685 = vpack.c.b16 %v653, %v653
      %v686 = vpack.c.b16 %v654, %v654
      %v687 = vpack.c.b16 %v655, %v655
      %v688 = vpack.c.b16 %v656, %v656
      %v689 = vpack.c.b16 %v657, %v657
      %v690 = vpack.c.b16 %v658, %v658
      %v691 = vpack.c.b16 %v659, %v659
      %v692 = vpack.c.b16 %v660, %v660
      %v693 = vpack.c.b16 %v661, %v661
      %v694 = vpack.c.b16 %v662, %v662
      %v695 = vpack.c.b16 %v663, %v663
      %v696 = vpack.c.b16 %v664, %v664
      %v697 = vpack.c.b16 %v665, %v665
      %v698 = vpack.c.b16 %v666, %v666
      %v699 = vpack.c.b16 %v667, %v667
      %v700 = vpack.c.b16 %v668, %v668
      %v701 = vpack.c.b16 %v669, %v669
      %v702 = vpack.c.b16 %v670, %v670
      %v703 = vpack.c.b16 %v671, %v671
      %v704 = vpack.c.b16 %v672, %v672
      %vm737 = vcmask 125952
      %738 = vst.msk [vmem:[%s223] sm:$0xf] %vm737, %v673
      %739 = vst.msk [vmem:[%s223 + $0x4] sm:$0xf] %vm737, %v674
      %740 = vst.msk [vmem:[%s223 + $0x8] sm:$0xf] %vm737, %v675
      %741 = vst.msk [vmem:[%s223 + $0xc] sm:$0xf] %vm737, %v676
      %742 = vst.msk [vmem:[%s223 + $0x10] sm:$0xf] %vm737, %v677
      %743 = vst.msk [vmem:[%s223 + $0x14] sm:$0xf] %vm737, %v678
      %744 = vst.msk [vmem:[%s223 + $0x18] sm:$0xf] %vm737, %v679
      %745 = vst.msk [vmem:[%s223 + $0x1c] sm:$0xf] %vm737, %v680
      %746 = vst.msk [vmem:[%s223 + $0x20] sm:$0xf] %vm737, %v681
      %747 = vst.msk [vmem:[%s223 + $0x24] sm:$0xf] %vm737, %v682
      %748 = vst.msk [vmem:[%s223 + $0x28] sm:$0xf] %vm737, %v683
      %749 = vst.msk [vmem:[%s223 + $0x2c] sm:$0xf] %vm737, %v684
      %750 = vst.msk [vmem:[%s223 + $0x30] sm:$0xf] %vm737, %v685
      %751 = vst.msk [vmem:[%s223 + $0x34] sm:$0xf] %vm737, %v686
      %752 = vst.msk [vmem:[%s223 + $0x38] sm:$0xf] %vm737, %v687
      %753 = vst.msk [vmem:[%s223 + $0x3c] sm:$0xf] %vm737, %v688
      %754 = vst.msk [vmem:[%s223 + $0x40] sm:$0xf] %vm737, %v689
      %755 = vst.msk [vmem:[%s223 + $0x44] sm:$0xf] %vm737, %v690
      %756 = vst.msk [vmem:[%s223 + $0x48] sm:$0xf] %vm737, %v691
      %757 = vst.msk [vmem:[%s223 + $0x4c] sm:$0xf] %vm737, %v692
      %758 = vst.msk [vmem:[%s223 + $0x50] sm:$0xf] %vm737, %v693
      %759 = vst.msk [vmem:[%s223 + $0x54] sm:$0xf] %vm737, %v694
      %760 = vst.msk [vmem:[%s223 + $0x58] sm:$0xf] %vm737, %v695
      %761 = vst.msk [vmem:[%s223 + $0x5c] sm:$0xf] %vm737, %v696
      %762 = vst.msk [vmem:[%s223 + $0x60] sm:$0xf] %vm737, %v697
      %763 = vst.msk [vmem:[%s223 + $0x64] sm:$0xf] %vm737, %v698
      %764 = vst.msk [vmem:[%s223 + $0x68] sm:$0xf] %vm737, %v699
      %765 = vst.msk [vmem:[%s223 + $0x6c] sm:$0xf] %vm737, %v700
      %766 = vst.msk [vmem:[%s223 + $0x70] sm:$0xf] %vm737, %v701
      %767 = vst.msk [vmem:[%s223 + $0x74] sm:$0xf] %vm737, %v702
      %768 = vst.msk [vmem:[%s223 + $0x78] sm:$0xf] %vm737, %v703
      %769 = vst.msk [vmem:[%s223 + $0x7c] sm:$0xf] %vm737, %v704
      %s770 = smul.u32 32, %s18
      %p771 = scmp.lt.s32.totalorder %s770, 255
      %s772 = scalar_select %p771, %s770, 255
      %p773 = scmp.lt.s32.totalorder %s19, 0
      %s774 = scalar_select %p773, %s19, 0
      %s775 = sadd.s32 %s774, %s772
      %s776 = smul.addr %s775, 4
      %s777 = scalar_lea.vmem %s3, %s776
      // Predicated region
      $region33: #{tpu_custom_call.1} parent=31 // pred_check
        %p778 = pneg %p124
      $region34: #{tpu_custom_call.1} parent=31 // pred_check_branch
        %780 = sbr.rel (%p778) target = $region36
      $region35: #{tpu_custom_call.1} parent=31 // pred_region
        %s781 = smul.u32 32, %s18
      $region36: #{tpu_custom_call.1} parent=31 // pred_fallthru
        _
    $region32: #{tpu_custom_call.1} parent=5 // pred_fallthru
      _
    %p782 = scmp.le.s32.totalorder 2, %s9
    // Predicated region
    $region37: #{tpu_custom_call.1} parent=5 // pred_check
      %p783 = pneg %p782
    $region38: #{tpu_custom_call.1} parent=5 // pred_check_branch
      %785 = sbr.rel (%p783) target = $region40
    $region39: #{tpu_custom_call.1} parent=5 // pred_region
      %s786 = ssub.s32 %s9, 2
      // Predicated region
      $region41: #{tpu_custom_call.1} parent=39 // pred_check
        %p787 = pneg %p130
      $region42: #{tpu_custom_call.1} parent=39 // pred_check_branch
        %789 = sbr.rel (%p787) target = $region44
      $region43: #{tpu_custom_call.1} parent=39 // pred_region
        %s790 = smul.u32 32, %s20
        %p791 = scmp.lt.s32.totalorder %s790, 255
        %s792 = scalar_select %p791, %s790, 255
        %p793 = scmp.lt.s32.totalorder %s21, 0
        %s794 = scalar_select %p793, %s21, 0
        %s795 = sadd.s32 %s794, %s792
        %s796 = smul.addr %s795, 4
        %s797 = scalar_lea.vmem %s3, %s796
      $region44: #{tpu_custom_call.1} parent=39 // pred_fallthru
        _
    $region40: #{tpu_custom_call.1} parent=5 // pred_fallthru
      _
  $region6: #{tpu_custom_call.1} parent=0 // loop_footer
    %s13 = sadd.s32 1, %s9
  $region7: #{tpu_custom_call.1} parent=0 // loop_footer_branch
    %8 = sbr.rel target = $region3
  $region8: #{tpu_custom_call.1} parent=0 // loop_exit
    _

</llo_original>
